<compile_context>
chip_gen: v5e
topology: v5e:2x2
jax: 0.10.0
libtpu: 0.0.40
codegen_flags: <defaults>
</compile_context>

<pallas_src>
import functools

import numpy as np
import jax
import jax.numpy as jnp
from jax import lax
from jax.experimental import pallas as pl
from jax.experimental.pallas import tpu as pltpu

_BN_EPS = 1e-5
_LANE = 128


def _round_up(x, m):
    return ((x + m - 1) // m) * m


# ----------------------------------------------------------------------------
# Pallas kernel: fused chain of (matmul + bias [+ ReLU]) layers
# ----------------------------------------------------------------------------
def _fused_block_kernel(*refs, acts):
    # refs = (x_ref, w0, b0, w1, b1, ..., o_ref); acts[j] -> ReLU after layer j.
    x_ref = refs[0]
    o_ref = refs[-1]
    h = x_ref[...]                      # load once; no redundant cast chain
    for j, relu in enumerate(acts):
        w = refs[1 + 2 * j][...]        # resident bf16 weight tile
        b = refs[2 + 2 * j][...]        # resident f32 bias row
        h = jnp.dot(h.astype(w.dtype), w,
                    preferred_element_type=jnp.float32) + b   # f32 epilogue
        if relu:
            h = jnp.maximum(h, 0.0)
    o_ref[...] = h.astype(o_ref.dtype)


def fused_linear_chain(x, weights, biases, acts, *, vmem_budget_bytes=6 << 20):
    """Fused chain of y = x @ W + b (+ReLU) on a channels-last (M, Cin) slab.

    weights[j]: (C_j, C_{j+1}) (output dims 128-aligned for lane-dense stores);
    biases[j]: (1, C_{j+1}) f32; acts[j]: bool (ReLU after layer j).
    """
    M, Cin = x.shape
    Cout = weights[-1].shape[1]
    max_c = max(w.shape[1] for w in weights)
    ib = x.dtype.itemsize

    # VMEM-budget-driven row tile (fewer, fatter grid steps).  Resident weights
    # and biases are double-buffered by the default pipeline -> count them 2x.
    weight_bytes = sum(2 * w.size * w.dtype.itemsize for w in weights) \
        + sum(2 * b.size * b.dtype.itemsize for b in biases)
    budget = max(1 << 20, vmem_budget_bytes - weight_bytes)
    per_row = (2 * Cin * ib            # double-buffered input rows
               + 2 * Cout * ib         # double-buffered output rows
               + 4 * max_c * 4)        # live f32/bf16 intermediates
    tm = max(8, min(budget // per_row, 4096))
    tm = (tm // 8) * 8
    # At least 2 row programs (when M allows) so "parallel" can use both
    # TensorCores on v7x; negligible cost on v5e/v6e.
    tm = min(tm, _round_up(pl.cdiv(M, 2), 8) if M > 8 else _round_up(M, 8))
    tm = max(tm, 8)
    grid = (pl.cdiv(M, tm),)
    # No host-side row padding: Pallas masks the partial last block; garbage
    # rows never mix into valid rows and OOB output rows are dropped.

    in_specs = [pl.BlockSpec((tm, Cin), lambda i: (i, 0))]
    args = [x]
    for w, b in zip(weights, biases):
        # Constant block index -> stays resident in VMEM across row steps.
        in_specs.append(pl.BlockSpec(w.shape, lambda i: (0, 0)))
        in_specs.append(pl.BlockSpec(b.shape, lambda i: (0, 0)))
        args.append(w)
        args.append(b)

    vmem_est = (2 * tm * Cin * ib + 2 * tm * Cout * ib
                + weight_bytes + 6 * tm * max_c * 4)
    vmem_limit = int(min(max(vmem_est + (4 << 20), 16 << 20), 32 << 20))

    out = pl.pallas_call(
        functools.partial(_fused_block_kernel, acts=tuple(acts)),
        out_shape=jax.ShapeDtypeStruct((M, Cout), x.dtype),
        grid=grid,
        in_specs=in_specs,
        out_specs=pl.BlockSpec((tm, Cout), lambda i: (i, 0)),
        compiler_params=pltpu.CompilerParams(
            dimension_semantics=("parallel",),
            vmem_limit_bytes=vmem_limit),
    )(*args)
    return out


# ----------------------------------------------------------------------------
# Parameter construction: random conv weights + eval-mode BN stats, pre-folded
# ----------------------------------------------------------------------------
def init_conv2d_block_params(key, channels, ksize):
    """List of {'w': (k, k, Cin, Cout) HWIO f32, 'b': (1, Cout) f32} layers.

    For all but the last layer, eval-mode BatchNorm (gamma, beta, running
    mean/var) is folded into w/b; the last layer is a plain Conv2d with bias.
    Arrays only -> jit-friendly pytree.
    """
    layers = []
    n = len(channels) - 1
    keys = jax.random.split(key, 2 * n)
    for j in range(n):
        cin, cout = channels[j], channels[j + 1]
        k_w, k_b = keys[2 * j], keys[2 * j + 1]
        fan_in = cin * ksize * ksize
        w = jax.random.normal(k_w, (ksize, ksize, cin, cout), jnp.float32) / np.sqrt(fan_in)
        if j < n - 1:
            g = jax.random.split(k_b, 4)
            gamma = 1.0 + 0.1 * jax.random.normal(g[0], (cout,), jnp.float32)
            beta = 0.1 * jax.random.normal(g[1], (cout,), jnp.float32)
            mean = 0.1 * jax.random.normal(g[2], (cout,), jnp.float32)
            var = jnp.abs(1.0 + 0.1 * jax.random.normal(g[3], (cout,), jnp.float32))
            scale = gamma / jnp.sqrt(var + _BN_EPS)
            w = w * scale                                  # fold BN scale into W
            b = (beta - mean * scale).reshape(1, cout)     # fold BN shift into bias
        else:
            b = 0.01 * jax.random.normal(k_b, (1, cout), jnp.float32)
        layers.append(dict(w=w, b=b))
    return layers


# ----------------------------------------------------------------------------
# Host-side weight prep + forward wrappers (layout plumbing around the kernel)
# ----------------------------------------------------------------------------
def _prepare_fused_weights(params, matmul_dtype):
    """Flatten 1x1-conv weights; zero-pad each layer's output channels (and the
    matching next-layer input rows) to a multiple of 128 for lane-dense stores;
    cast matmul operands to bf16.  The network input channel dim is NOT padded."""
    true_c = [params[0]["w"].shape[2]] + [p["w"].shape[3] for p in params]
    pad_c = [true_c[0]] + [_round_up(c, _LANE) for c in true_c[1:]]
    weights, biases = [], []
    for j, p in enumerate(params):
        w = p["w"].reshape(true_c[j], true_c[j + 1])
        w = jnp.pad(w, ((0, pad_c[j] - true_c[j]), (0, pad_c[j + 1] - true_c[j + 1])))
        b = jnp.pad(p["b"], ((0, 0), (0, pad_c[j + 1] - true_c[j + 1])))
        weights.append(w.astype(matmul_dtype))
        biases.append(b.astype(jnp.float32))
    return weights, biases, true_c[-1]


def _im2col_nhwc(x, kh, kw):
    """(B, H, W, C) -> (B*Ho*Wo, kh*kw*C); (dy, dx, c) ordering == HWIO flatten."""
    B, H, W, C = x.shape
    Ho, Wo = H - kh + 1, W - kw + 1
    cols = [x[:, dy:dy + Ho, dx:dx + Wo, :] for dy in range(kh) for dx in range(kw)]
    p = jnp.concatenate(cols, axis=-1)
    return p.reshape(B * Ho * Wo, kh * kw * C), (B, Ho, Wo)


def conv2d_block_forward(params, x, *, ksize, matmul_dtype=jnp.bfloat16):
    """Pallas forward of Conv2DBlock (eval mode). x: (B, C, H, W) NCHW (PyTorch)."""
    n = len(params)
    acts = [True] * (n - 1) + [False]

    if ksize == 1:
        # 1x1 convs keep spatial dims -> whole block in ONE fused pallas_call;
        # intermediates never round-trip HBM.
        B, C, H, W = x.shape
        h = jnp.transpose(x, (0, 2, 3, 1)).reshape(B * H * W, C)  # channels-last once
        weights, biases, cout = _prepare_fused_weights(params, matmul_dtype)
        y = fused_linear_chain(h, weights, biases, acts)
        y = y[:, :cout]                                            # drop lane padding
        return jnp.transpose(y.reshape(B, H, W, cout), (0, 3, 1, 2))

    # ksize > 1 ('VALID'): spatial shrinks per layer, so each layer is its own
    # fused (matmul + bias [+ ReLU]) kernel; activations stay NHWC between
    # layers (no per-layer transposes) with 128-padded output channels for
    # lane-dense stores, sliced back to true channels before the next im2col.
    # TODO(synk): move im2col in-kernel (shifted-slice DMA gathers + VMEM
    # accumulator over kh*kw taps) so the expanded patch matrix never hits HBM.
    h = jnp.transpose(x, (0, 2, 3, 1))                             # NHWC once at entry
    for j, p in enumerate(params):
        kh, kw, cin, cout = p["w"].shape
        cols, (B, Ho, Wo) = _im2col_nhwc(h[..., :cin], kh, kw)
        cout_p = _round_up(cout, _LANE)
        w = jnp.pad(p["w"].reshape(kh * kw * cin, cout),
                    ((0, 0), (0, cout_p - cout))).astype(matmul_dtype)
        b = jnp.pad(p["b"], ((0, 0), (0, cout_p - cout))).astype(jnp.float32)
        y = fused_linear_chain(cols, [w], [b], [acts[j]])
        h = y.reshape(B, Ho, Wo, cout_p)
    cout = params[-1]["w"].shape[3]
    return jnp.transpose(h[..., :cout], (0, 3, 1, 2))


# ----------------------------------------------------------------------------
# Plain-JAX reference (independent f32 path via lax.conv) for validation
# ----------------------------------------------------------------------------
def conv2d_block_reference(params, x, *, ksize):
    del ksize  # encoded in the stored HWIO weight shapes
    h = x
    n = len(params)
    for j, p in enumerate(params):
        h = lax.conv_general_dilated(
            h, p["w"], window_strides=(1, 1), padding="VALID",
            dimension_numbers=("NCHW", "HWIO", "NCHW"))
        h = h + p["b"].reshape(1, -1, 1, 1)
        if j < n - 1:
            h = jnp.maximum(h, 0.0)
    return h


# ----------------------------------------------------------------------------
# Main
# ----------------------------------------------------------------------------
if __name__ == "__main__":
    key = jax.random.PRNGKey(0)
    k_p1, k_x1, k_p2, k_x2 = jax.random.split(key, 4)

    # Case 1: ksize=1 -> one fused kernel for the whole block.
    B, Cin, H, W = 2, 4, 16, 16
    channels = (Cin, 32, 64, 32)
    params1 = init_conv2d_block_params(k_p1, channels, ksize=1)
    x1 = jax.random.normal(k_x1, (B, Cin, H, W), jnp.float32)
    fwd1 = jax.jit(functools.partial(conv2d_block_forward, ksize=1))
    y1 = jax.block_until_ready(fwd1(params1, x1))
    y1_ref = conv2d_block_reference(params1, x1, ksize=1)
    assert y1.shape == (B, channels[-1], H, W)
    np.testing.assert_allclose(np.asarray(y1), np.asarray(y1_ref), rtol=2e-2, atol=2e-2)

    # Case 2: ksize=3 ('VALID', spatial shrinks each layer).
    B2, Cin2, H2, W2 = 2, 4, 12, 12
    channels2 = (Cin2, 16, 8)
    params2 = init_conv2d_block_params(k_p2, channels2, ksize=3)
    x2 = jax.random.normal(k_x2, (B2, Cin2, H2, W2), jnp.float32)
    fwd2 = jax.jit(functools.partial(conv2d_block_forward, ksize=3))
    y2 = jax.block_until_ready(fwd2(params2, x2))
    y2_ref = conv2d_block_reference(params2, x2, ksize=3)
    assert y2.shape == (B2, channels2[-1], H2 - 4, W2 - 4)
    np.testing.assert_allclose(np.asarray(y2), np.asarray(y2_ref), rtol=2e-2, atol=2e-2)

    assert np.isfinite(np.asarray(y1)).all() and np.isfinite(np.asarray(y2)).all()
    print("KERNEL_OK")
</pallas_src>

<mosaic_0001>
module attributes {stable_mosaic.version = 11 : i64} {
  func.func @_fused_block_kernel(%arg0: i32, %arg1: memref<256x4xf32, #tpu.memory_space<vmem>>, %arg2: memref<4x128xbf16, #tpu.memory_space<vmem>>, %arg3: memref<1x128xf32, #tpu.memory_space<vmem>>, %arg4: memref<128x128xbf16, #tpu.memory_space<vmem>>, %arg5: memref<1x128xf32, #tpu.memory_space<vmem>>, %arg6: memref<128x128xbf16, #tpu.memory_space<vmem>>, %arg7: memref<1x128xf32, #tpu.memory_space<vmem>>, %arg8: memref<256x128xf32, #tpu.memory_space<vmem>>) attributes {dimension_semantics = [#tpu.dimension_semantics<parallel>], iteration_bounds = array<i64: 2>, scalar_prefetch = 0 : i64, scratch_operands = 0 : i64, tpu.core_type = #tpu.core_type<tc>, window_params = [{transform_indices = @transform_0, window_bounds = array<i64: 256, 4>}, {pipeline_mode = #tpu.pipeline_mode<synchronous>, transform_indices = @transform_1, window_bounds = array<i64: 4, 128>}, {pipeline_mode = #tpu.pipeline_mode<synchronous>, transform_indices = @transform_2, window_bounds = array<i64: 1, 128>}, {pipeline_mode = #tpu.pipeline_mode<synchronous>, transform_indices = @transform_3, window_bounds = array<i64: 128, 128>}, {pipeline_mode = #tpu.pipeline_mode<synchronous>, transform_indices = @transform_4, window_bounds = array<i64: 1, 128>}, {pipeline_mode = #tpu.pipeline_mode<synchronous>, transform_indices = @transform_5, window_bounds = array<i64: 128, 128>}, {pipeline_mode = #tpu.pipeline_mode<synchronous>, transform_indices = @transform_6, window_bounds = array<i64: 1, 128>}, {transform_indices = @transform_7, window_bounds = array<i64: 256, 128>}]} {
    %c0 = arith.constant 0 : index
    %c0_0 = arith.constant 0 : index
    %0 = vector.load %arg1[%c0, %c0_0] : memref<256x4xf32, #tpu.memory_space<vmem>>, vector<256x4xf32>
    %c0_1 = arith.constant 0 : index
    %c0_2 = arith.constant 0 : index
    %1 = vector.load %arg2[%c0_1, %c0_2] : memref<4x128xbf16, #tpu.memory_space<vmem>>, vector<4x128xbf16>
    %c0_3 = arith.constant 0 : index
    %c0_4 = arith.constant 0 : index
    %2 = vector.load %arg3[%c0_3, %c0_4] : memref<1x128xf32, #tpu.memory_space<vmem>>, vector<1x128xf32>
    %3 = arith.truncf %0 : vector<256x4xf32> to vector<256x4xbf16>
    %cst = arith.constant dense<0.000000e+00> : vector<256x128xf32>
    %4 = tpu.matmul %3, %1, %cst {dimension_numbers = #tpu.dot_dimension_numbers<[1], [0], [0], [1], [0, 0, 1, 1], [], []>} : vector<256x4xbf16>, vector<4x128xbf16>, vector<256x128xf32> -> vector<256x128xf32>
    %5 = vector.broadcast %2 : vector<1x128xf32> to vector<256x128xf32>
    %6 = arith.addf %4, %5 : vector<256x128xf32>
    %cst_5 = arith.constant 0.000000e+00 : f32
    %7 = vector.broadcast %cst_5 : f32 to vector<256x128xf32>
    %8 = arith.maximumf %6, %7 : vector<256x128xf32>
    %c0_6 = arith.constant 0 : index
    %c0_7 = arith.constant 0 : index
    %9 = vector.load %arg4[%c0_6, %c0_7] : memref<128x128xbf16, #tpu.memory_space<vmem>>, vector<128x128xbf16>
    %c0_8 = arith.constant 0 : index
    %c0_9 = arith.constant 0 : index
    %10 = vector.load %arg5[%c0_8, %c0_9] : memref<1x128xf32, #tpu.memory_space<vmem>>, vector<1x128xf32>
    %11 = arith.truncf %8 : vector<256x128xf32> to vector<256x128xbf16>
    %cst_10 = arith.constant dense<0.000000e+00> : vector<256x128xf32>
    %12 = tpu.matmul %11, %9, %cst_10 {dimension_numbers = #tpu.dot_dimension_numbers<[1], [0], [0], [1], [0, 0, 1, 1], [], []>} : vector<256x128xbf16>, vector<128x128xbf16>, vector<256x128xf32> -> vector<256x128xf32>
    %13 = vector.broadcast %10 : vector<1x128xf32> to vector<256x128xf32>
    %14 = arith.addf %12, %13 : vector<256x128xf32>
    %cst_11 = arith.constant 0.000000e+00 : f32
    %15 = vector.broadcast %cst_11 : f32 to vector<256x128xf32>
    %16 = arith.maximumf %14, %15 : vector<256x128xf32>
    %c0_12 = arith.constant 0 : index
    %c0_13 = arith.constant 0 : index
    %17 = vector.load %arg6[%c0_12, %c0_13] : memref<128x128xbf16, #tpu.memory_space<vmem>>, vector<128x128xbf16>
    %c0_14 = arith.constant 0 : index
    %c0_15 = arith.constant 0 : index
    %18 = vector.load %arg7[%c0_14, %c0_15] : memref<1x128xf32, #tpu.memory_space<vmem>>, vector<1x128xf32>
    %19 = arith.truncf %16 : vector<256x128xf32> to vector<256x128xbf16>
    %cst_16 = arith.constant dense<0.000000e+00> : vector<256x128xf32>
    %20 = tpu.matmul %19, %17, %cst_16 {dimension_numbers = #tpu.dot_dimension_numbers<[1], [0], [0], [1], [0, 0, 1, 1], [], []>} : vector<256x128xbf16>, vector<128x128xbf16>, vector<256x128xf32> -> vector<256x128xf32>
    %21 = vector.broadcast %18 : vector<1x128xf32> to vector<256x128xf32>
    %22 = arith.addf %20, %21 : vector<256x128xf32>
    %c0_17 = arith.constant 0 : index
    %c0_18 = arith.constant 0 : index
    %23 = vector.load %arg8[%c0_17, %c0_18] : memref<256x128xf32, #tpu.memory_space<vmem>>, vector<256x128xf32>
    tpu.vector_store %arg8[%c0_17, %c0_18], %22 {strides = array<i32>} : memref<256x128xf32, #tpu.memory_space<vmem>>, vector<256x128xf32>,
    return
  }
  func.func @transform_0(%arg0: i32) -> (i32, i32) {
    %c0_i32 = arith.constant 0 : i32
    %c0_i32_0 = arith.constant 0 : i32
    return %arg0, %c0_i32 : i32, i32
  }
  func.func @transform_1(%arg0: i32) -> (i32, i32) {
    %c0_i32 = arith.constant 0 : i32
    %c0_i32_0 = arith.constant 0 : i32
    %c0_i32_1 = arith.constant 0 : i32
    return %c0_i32, %c0_i32_0 : i32, i32
  }
  func.func @transform_2(%arg0: i32) -> (i32, i32) {
    %c0_i32 = arith.constant 0 : i32
    %c0_i32_0 = arith.constant 0 : i32
    %c0_i32_1 = arith.constant 0 : i32
    return %c0_i32, %c0_i32_0 : i32, i32
  }
  func.func @transform_3(%arg0: i32) -> (i32, i32) {
    %c0_i32 = arith.constant 0 : i32
    %c0_i32_0 = arith.constant 0 : i32
    %c0_i32_1 = arith.constant 0 : i32
    return %c0_i32, %c0_i32_0 : i32, i32
  }
  func.func @transform_4(%arg0: i32) -> (i32, i32) {
    %c0_i32 = arith.constant 0 : i32
    %c0_i32_0 = arith.constant 0 : i32
    %c0_i32_1 = arith.constant 0 : i32
    return %c0_i32, %c0_i32_0 : i32, i32
  }
  func.func @transform_5(%arg0: i32) -> (i32, i32) {
    %c0_i32 = arith.constant 0 : i32
    %c0_i32_0 = arith.constant 0 : i32
    %c0_i32_1 = arith.constant 0 : i32
    return %c0_i32, %c0_i32_0 : i32, i32
  }
  func.func @transform_6(%arg0: i32) -> (i32, i32) {
    %c0_i32 = arith.constant 0 : i32
    %c0_i32_0 = arith.constant 0 : i32
    %c0_i32_1 = arith.constant 0 : i32
    return %c0_i32, %c0_i32_0 : i32, i32
  }
  func.func @transform_7(%arg0: i32) -> (i32, i32) {
    %c0_i32 = arith.constant 0 : i32
    %c0_i32_0 = arith.constant 0 : i32
    return %arg0, %c0_i32 : i32, i32
  }
}

</mosaic_0001>

<llo_original>
// kernel: conv2d_block_forward.1
$region0: #{conv2d_block_forward.1}
  #allocation0 [shape = 'u32[]', space=smem, size = 0x4, offset = 0x4, fixed_abs, tag = 'smem constant byte address 0x4 - core index']
  #allocation1 [shape = 'u32[72,128]{1,0:T(1,128)}', space=vmem, size = 0x9000, scoped, tag = 'internal scratch']
  %s0 = inlined_call_operand.vmem [shape: f32[512,4], index: 0, kind: input, shape index: {}]
  %s1 = inlined_call_operand.vmem [shape: bf16[4,128], index: 1, kind: input, shape index: {}]
  %s2 = inlined_call_operand.vmem [shape: f32[1,128], index: 2, kind: input, shape index: {}]
  %s3 = inlined_call_operand.vmem [shape: bf16[128,128], index: 3, kind: input, shape index: {}]
  %s4 = inlined_call_operand.vmem [shape: f32[1,128], index: 4, kind: input, shape index: {}]
  %s5 = inlined_call_operand.vmem [shape: bf16[128,128], index: 5, kind: input, shape index: {}]
  %s6 = inlined_call_operand.vmem [shape: f32[1,128], index: 6, kind: input, shape index: {}]
  %s7 = inlined_call_operand.hbm [shape: f32[512,128], index: 7, kind: output, shape index: {}]
  %s8 = sld [smem:[#allocation0]]
  $region61: #{conv2d_block_forward.1} parent=0
    _
  %s10 = ssub.s32 1, %s8
  %s11 = scalar_select 0, %s10, %s8
  $region1: #{conv2d_block_forward.1} parent=0
    #allocation2 [shape = 'u8[262144]{0}', space=vmem, size = 0x40000, scoped, tag = 'output window, operand 0']
    #allocation3 [shape = 's32[2]{0}', space=sflag, size = 0x8, scoped, tag = 'scoped memory for conv2d_block_forward.1']
    %12 = vsyncpa [#allocation3], 0
    %s13 = scalar_lea.sflag [#allocation3], 1
    %14 = vsyncpa %s13, 0
    loop: start=0, step=1, limit=4
    $region2: #{conv2d_block_forward.1} parent=1 // loop_pre_header
      _
    $region3: #{conv2d_block_forward.1} parent=1 // loop_header
      %s16 = sphi 0, %s20
      %p17 = scmp.ge.s32.totalorder %s16, 4
      %s26 = sphi 0, %s28
      %s29 = sphi 0, %s26
      %s30 = sphi 0, %s29
      %s46 = sphi 0, %s30
      %s50 = sphi 0, %s50
      %s52 = sphi 0, %s50
      %s53 = sphi 0, %s52
      %s67 = sphi 0, %s53
      %s71 = sphi 0, %s71
      %s73 = sphi 0, %s71
      %s74 = sphi 0, %s73
      %s88 = sphi 0, %s74
      %s92 = sphi 0, %s92
      %s94 = sphi 0, %s92
      %s95 = sphi 0, %s94
      %s109 = sphi 0, %s95
      %s113 = sphi 0, %s113
      %s115 = sphi 0, %s113
      %s116 = sphi 0, %s115
      %s130 = sphi 0, %s116
      %s134 = sphi 0, %s134
      %s136 = sphi 0, %s134
      %s137 = sphi 0, %s136
      %s151 = sphi 0, %s137
      %s155 = sphi 0, %s155
      %s157 = sphi 0, %s155
      %s158 = sphi 0, %s157
      %s172 = sphi 0, %s158
      %s178 = sphi 0, %s180
      %s181 = sphi 0, %s178
      %s182 = sphi 0, %s181
      %s198 = sphi 0, %s182
    $region4: #{conv2d_block_forward.1} parent=1 // loop_header_branch
      %19 = sbr.rel (%p17) target = $region8
    $region5: #{conv2d_block_forward.1} parent=1 // loop_body
      %s21 = ssub.s32 %s16, 1
      %s22 = ssub.s32 %s16, 2
      %s23 = sadd.s32 %s16, 1
      %s24 = ssub.s32 %s16, %s23
      %p25 = scmp.eq.s32.totalorder %s24, 0
      %s27 = sadd.s32 %s26, 1
      %s28 = scalar_select %p25, %s26, %s27
      %p31 = pneg %p25
      %p32 = scmp.eq.s32.totalorder %s16, 1
      %p33 = por %p31, %p32
      %p34 = scmp.ne.s32.totalorder %s26, %s29
      %p35 = scmp.eq.s32.totalorder %s16, 0
      %p36 = por %p34, %p35
      %p37 = scmp.ne.s32.totalorder %s26, %s29
      %p38 = scmp.eq.s32.totalorder %s21, 1
      %p39 = por %p37, %p38
      %p40 = scmp.ne.s32.totalorder %s29, %s30
      %p41 = scmp.eq.s32.totalorder %s21, 0
      %p42 = por %p40, %p41
      %p43 = scmp.ne.s32.totalorder %s29, %s30
      %p44 = scmp.eq.s32.totalorder %s22, 1
      %p45 = por %p43, %p44
      %p47 = scmp.ne.s32.totalorder %s30, %s46
      %p48 = scmp.eq.s32.totalorder %s22, 0
      %p49 = por %p47, %p48
      %s51 = sadd.s32 %s50, 1
      %p54 = scmp.eq.s32.totalorder %s16, 1
      %p55 = scmp.ne.s32.totalorder %s50, %s52
      %p56 = scmp.eq.s32.totalorder %s16, 0
      %p57 = por %p55, %p56
      %p58 = scmp.ne.s32.totalorder %s50, %s52
      %p59 = scmp.eq.s32.totalorder %s21, 1
      %p60 = por %p58, %p59
      %p61 = scmp.ne.s32.totalorder %s52, %s53
      %p62 = scmp.eq.s32.totalorder %s21, 0
      %p63 = por %p61, %p62
      %p64 = scmp.ne.s32.totalorder %s52, %s53
      %p65 = scmp.eq.s32.totalorder %s22, 1
      %p66 = por %p64, %p65
      %p68 = scmp.ne.s32.totalorder %s53, %s67
      %p69 = scmp.eq.s32.totalorder %s22, 0
      %p70 = por %p68, %p69
      %s72 = sadd.s32 %s71, 1
      %p75 = scmp.eq.s32.totalorder %s16, 1
      %p76 = scmp.ne.s32.totalorder %s71, %s73
      %p77 = scmp.eq.s32.totalorder %s16, 0
      %p78 = por %p76, %p77
      %p79 = scmp.ne.s32.totalorder %s71, %s73
      %p80 = scmp.eq.s32.totalorder %s21, 1
      %p81 = por %p79, %p80
      %p82 = scmp.ne.s32.totalorder %s73, %s74
      %p83 = scmp.eq.s32.totalorder %s21, 0
      %p84 = por %p82, %p83
      %p85 = scmp.ne.s32.totalorder %s73, %s74
      %p86 = scmp.eq.s32.totalorder %s22, 1
      %p87 = por %p85, %p86
      %p89 = scmp.ne.s32.totalorder %s74, %s88
      %p90 = scmp.eq.s32.totalorder %s22, 0
      %p91 = por %p89, %p90
      %s93 = sadd.s32 %s92, 1
      %p96 = scmp.eq.s32.totalorder %s16, 1
      %p97 = scmp.ne.s32.totalorder %s92, %s94
      %p98 = scmp.eq.s32.totalorder %s16, 0
      %p99 = por %p97, %p98
      %p100 = scmp.ne.s32.totalorder %s92, %s94
      %p101 = scmp.eq.s32.totalorder %s21, 1
      %p102 = por %p100, %p101
      %p103 = scmp.ne.s32.totalorder %s94, %s95
      %p104 = scmp.eq.s32.totalorder %s21, 0
      %p105 = por %p103, %p104
      %p106 = scmp.ne.s32.totalorder %s94, %s95
      %p107 = scmp.eq.s32.totalorder %s22, 1
      %p108 = por %p106, %p107
      %p110 = scmp.ne.s32.totalorder %s95, %s109
      %p111 = scmp.eq.s32.totalorder %s22, 0
      %p112 = por %p110, %p111
      %s114 = sadd.s32 %s113, 1
      %p117 = scmp.eq.s32.totalorder %s16, 1
      %p118 = scmp.ne.s32.totalorder %s113, %s115
      %p119 = scmp.eq.s32.totalorder %s16, 0
      %p120 = por %p118, %p119
      %p121 = scmp.ne.s32.totalorder %s113, %s115
      %p122 = scmp.eq.s32.totalorder %s21, 1
      %p123 = por %p121, %p122
      %p124 = scmp.ne.s32.totalorder %s115, %s116
      %p125 = scmp.eq.s32.totalorder %s21, 0
      %p126 = por %p124, %p125
      %p127 = scmp.ne.s32.totalorder %s115, %s116
      %p128 = scmp.eq.s32.totalorder %s22, 1
      %p129 = por %p127, %p128
      %p131 = scmp.ne.s32.totalorder %s116, %s130
      %p132 = scmp.eq.s32.totalorder %s22, 0
      %p133 = por %p131, %p132
      %s135 = sadd.s32 %s134, 1
      %p138 = scmp.eq.s32.totalorder %s16, 1
      %p139 = scmp.ne.s32.totalorder %s134, %s136
      %p140 = scmp.eq.s32.totalorder %s16, 0
      %p141 = por %p139, %p140
      %p142 = scmp.ne.s32.totalorder %s134, %s136
      %p143 = scmp.eq.s32.totalorder %s21, 1
      %p144 = por %p142, %p143
      %p145 = scmp.ne.s32.totalorder %s136, %s137
      %p146 = scmp.eq.s32.totalorder %s21, 0
      %p147 = por %p145, %p146
      %p148 = scmp.ne.s32.totalorder %s136, %s137
      %p149 = scmp.eq.s32.totalorder %s22, 1
      %p150 = por %p148, %p149
      %p152 = scmp.ne.s32.totalorder %s137, %s151
      %p153 = scmp.eq.s32.totalorder %s22, 0
      %p154 = por %p152, %p153
      %s156 = sadd.s32 %s155, 1
      %p159 = scmp.eq.s32.totalorder %s16, 1
      %p160 = scmp.ne.s32.totalorder %s155, %s157
      %p161 = scmp.eq.s32.totalorder %s16, 0
      %p162 = por %p160, %p161
      %p163 = scmp.ne.s32.totalorder %s155, %s157
      %p164 = scmp.eq.s32.totalorder %s21, 1
      %p165 = por %p163, %p164
      %p166 = scmp.ne.s32.totalorder %s157, %s158
      %p167 = scmp.eq.s32.totalorder %s21, 0
      %p168 = por %p166, %p167
      %p169 = scmp.ne.s32.totalorder %s157, %s158
      %p170 = scmp.eq.s32.totalorder %s22, 1
      %p171 = por %p169, %p170
      %p173 = scmp.ne.s32.totalorder %s158, %s172
      %p174 = scmp.eq.s32.totalorder %s22, 0
      %p175 = por %p173, %p174
      %s176 = ssub.s32 %s16, %s23
      %p177 = scmp.eq.s32.totalorder %s176, 0
      %s179 = sadd.s32 %s178, 1
      %s180 = scalar_select %p177, %s178, %s179
      %p183 = pneg %p177
      %p184 = scmp.eq.s32.totalorder %s16, 1
      %p185 = por %p183, %p184
      %p186 = scmp.ne.s32.totalorder %s178, %s181
      %p187 = scmp.eq.s32.totalorder %s16, 0
      %p188 = por %p186, %p187
      %p189 = scmp.ne.s32.totalorder %s178, %s181
      %p190 = scmp.eq.s32.totalorder %s21, 1
      %p191 = por %p189, %p190
      %p192 = scmp.ne.s32.totalorder %s181, %s182
      %p193 = scmp.eq.s32.totalorder %s21, 0
      %p194 = por %p192, %p193
      %p195 = scmp.ne.s32.totalorder %s181, %s182
      %p196 = scmp.eq.s32.totalorder %s22, 1
      %p197 = por %p195, %p196
      %p199 = scmp.ne.s32.totalorder %s182, %s198
      %p200 = scmp.eq.s32.totalorder %s22, 0
      %p201 = por %p199, %p200
      %p202 = scmp.le.s32.totalorder 1, %s16
      %p203 = scmp.lt.s32.totalorder %s16, 3
      %p204 = pnand %p202, %p203
      %p205 = pneg %p204
      // Predicated region
      $region9: #{conv2d_block_forward.1} parent=5 // pred_check
        _
      $region10: #{conv2d_block_forward.1} parent=5 // pred_check_branch
        %207 = sbr.rel (%p204) target = $region12
      $region11: #{conv2d_block_forward.1} parent=5 // pred_region
        %s208 = ssub.s32 %s16, 1
        // Predicated region
        $region13: #{conv2d_block_forward.1} parent=11 // pred_check
          %p209 = pneg %p63
        $region14: #{conv2d_block_forward.1} parent=11 // pred_check_branch
          %211 = sbr.rel (%p209) target = $region16
        $region15: #{conv2d_block_forward.1} parent=11 // pred_region
          _
        $region16: #{conv2d_block_forward.1} parent=11 // pred_fallthru
          _
        // Predicated region
        $region17: #{conv2d_block_forward.1} parent=11 // pred_check
          %p212 = pneg %p84
        $region18: #{conv2d_block_forward.1} parent=11 // pred_check_branch
          %214 = sbr.rel (%p212) target = $region20
        $region19: #{conv2d_block_forward.1} parent=11 // pred_region
          _
        $region20: #{conv2d_block_forward.1} parent=11 // pred_fallthru
          _
        // Predicated region
        $region21: #{conv2d_block_forward.1} parent=11 // pred_check
          %p215 = pneg %p105
        $region22: #{conv2d_block_forward.1} parent=11 // pred_check_branch
          %217 = sbr.rel (%p215) target = $region24
        $region23: #{conv2d_block_forward.1} parent=11 // pred_region
          _
        $region24: #{conv2d_block_forward.1} parent=11 // pred_fallthru
          _
        // Predicated region
        $region25: #{conv2d_block_forward.1} parent=11 // pred_check
          %p218 = pneg %p126
        $region26: #{conv2d_block_forward.1} parent=11 // pred_check_branch
          %220 = sbr.rel (%p218) target = $region28
        $region27: #{conv2d_block_forward.1} parent=11 // pred_region
          _
        $region28: #{conv2d_block_forward.1} parent=11 // pred_fallthru
          _
        // Predicated region
        $region29: #{conv2d_block_forward.1} parent=11 // pred_check
          %p221 = pneg %p147
        $region30: #{conv2d_block_forward.1} parent=11 // pred_check_branch
          %223 = sbr.rel (%p221) target = $region32
        $region31: #{conv2d_block_forward.1} parent=11 // pred_region
          _
        $region32: #{conv2d_block_forward.1} parent=11 // pred_fallthru
          _
        // Predicated region
        $region33: #{conv2d_block_forward.1} parent=11 // pred_check
          %p224 = pneg %p168
        $region34: #{conv2d_block_forward.1} parent=11 // pred_check_branch
          %226 = sbr.rel (%p224) target = $region36
        $region35: #{conv2d_block_forward.1} parent=11 // pred_region
          _
        $region36: #{conv2d_block_forward.1} parent=11 // pred_fallthru
          _
      $region12: #{conv2d_block_forward.1} parent=5 // pred_fallthru
        _
      %p227 = scmp.lt.s32.totalorder %s16, 2
      // Predicated region
      $region37: #{conv2d_block_forward.1} parent=5 // pred_check
        %p228 = pneg %p227
      $region38: #{conv2d_block_forward.1} parent=5 // pred_check_branch
        %230 = sbr.rel (%p228) target = $region40
      $region39: #{conv2d_block_forward.1} parent=5 // pred_region
        // Predicated region
        $region41: #{conv2d_block_forward.1} parent=39 // pred_check
          %p231 = pneg %p36
        $region42: #{conv2d_block_forward.1} parent=39 // pred_check_branch
          %233 = sbr.rel (%p231) target = $region44
        $region43: #{conv2d_block_forward.1} parent=39 // pred_region
          %s234 = smul.u32 32, %s16
          %p235 = scmp.lt.s32.totalorder %s234, 63
          %s236 = scalar_select %p235, %s234, 63
          %s237 = smul.addr %s236, 8
          %s238 = scalar_lea.vmem %s0, %s237
          %s239 = smul.u32 32, %s16
        $region44: #{conv2d_block_forward.1} parent=39 // pred_fallthru
          _
      $region40: #{conv2d_block_forward.1} parent=5 // pred_fallthru
        _
      %p240 = scmp.le.s32.totalorder 1, %s16
      %p241 = scmp.lt.s32.totalorder %s16, 3
      %p242 = pnand %p240, %p241
      %p243 = pneg %p242
      // Predicated region
      $region45: #{conv2d_block_forward.1} parent=5 // pred_check
        _
      $region46: #{conv2d_block_forward.1} parent=5 // pred_check_branch
        %245 = sbr.rel (%p242) target = $region48
      $region47: #{conv2d_block_forward.1} parent=5 // pred_region
        %s246 = ssub.s32 %s16, 1
        %s247 = smul.u32 32, %s21
        %p248 = scmp.lt.s32.totalorder %s247, 63
        %s249 = scalar_select %p248, %s247, 63
        %s250 = smul.addr %s249, 8
        %s251 = scalar_lea.vmem %s0, %s250
        %p252 = pneg %p42
        %p253 = pneg %p39
        %p254 = pneg %p63
        %p255 = pneg %p60
        %p256 = pneg %p84
        %p257 = pneg %p81
        %p258 = pneg %p105
        %p259 = pneg %p102
        %p260 = pneg %p126
        %p261 = pneg %p123
        %p262 = pneg %p147
        %p263 = pneg %p144
        %p264 = pneg %p168
        %p265 = pneg %p165
        %p266 = pneg %p194
        %p267 = pneg %p191
        %s268 = sand.u32 %s181, 1
        %s269 = scalar_lea.sflag [#allocation3], %s268
        %s270 = sand.u32 %s181, 1
        %s271 = smul.addr %s270, 256
        %s272 = scalar_lea.vmem [#allocation2], %s271
        %s273 = smul.u32 32, %s21
        %p274 = scmp.lt.s32.totalorder %s273, 63
        %s275 = scalar_select %p274, %s273, 63
        %s276 = smul.addr %s275, 8
        %s277 = scalar_lea.vmem %s0, %s276
        %s278 = smul.u32 32, %s21
        %s279 = smul.u32 32, %s21
        %v281 = vld [vmem:[%s277] sm:$0xff]
        %v282 = vld [vmem:[%s277 + $0x8] sm:$0xff]
        %v283 = vld [vmem:[%s277 + $0x10] sm:$0xff]
        %v284 = vld [vmem:[%s277 + $0x18] sm:$0xff]
        %v285 = vld [vmem:[%s277 + $0x20] sm:$0xff]
        %v286 = vld [vmem:[%s277 + $0x28] sm:$0xff]
        %v287 = vld [vmem:[%s277 + $0x30] sm:$0xff]
        %v288 = vld [vmem:[%s277 + $0x38] sm:$0xff]
        %v289 = vld [vmem:[%s277 + $0x40] sm:$0xff]
        %v290 = vld [vmem:[%s277 + $0x48] sm:$0xff]
        %v291 = vld [vmem:[%s277 + $0x50] sm:$0xff]
        %v292 = vld [vmem:[%s277 + $0x58] sm:$0xff]
        %v293 = vld [vmem:[%s277 + $0x60] sm:$0xff]
        %v294 = vld [vmem:[%s277 + $0x68] sm:$0xff]
        %v295 = vld [vmem:[%s277 + $0x70] sm:$0xff]
        %v296 = vld [vmem:[%s277 + $0x78] sm:$0xff]
        %v297 = vld [vmem:[%s277 + $0x80] sm:$0xff]
        %v298 = vld [vmem:[%s277 + $0x88] sm:$0xff]
        %v299 = vld [vmem:[%s277 + $0x90] sm:$0xff]
        %v300 = vld [vmem:[%s277 + $0x98] sm:$0xff]
        %v301 = vld [vmem:[%s277 + $0xa0] sm:$0xff]
        %v302 = vld [vmem:[%s277 + $0xa8] sm:$0xff]
        %v303 = vld [vmem:[%s277 + $0xb0] sm:$0xff]
        %v304 = vld [vmem:[%s277 + $0xb8] sm:$0xff]
        %v305 = vld [vmem:[%s277 + $0xc0] sm:$0xff]
        %v306 = vld [vmem:[%s277 + $0xc8] sm:$0xff]
        %v307 = vld [vmem:[%s277 + $0xd0] sm:$0xff]
        %v308 = vld [vmem:[%s277 + $0xd8] sm:$0xff]
        %v309 = vld [vmem:[%s277 + $0xe0] sm:$0xff]
        %v310 = vld [vmem:[%s277 + $0xe8] sm:$0xff]
        %v311 = vld [vmem:[%s277 + $0xf0] sm:$0xff]
        %v312 = vld [vmem:[%s277 + $0xf8] sm:$0xff]
        %v313 = vld [vmem:[%s1] sm:$0x3]
        %v314 = vld [vmem:[%s2] sm:$0x1]
        %v315 = vpack.c.bf16 %v282, %v281
        %v316 = vpack.c.bf16 %v284, %v283
        %v317 = vpack.c.bf16 %v286, %v285
        %v318 = vpack.c.bf16 %v288, %v287
        %v319 = vpack.c.bf16 %v290, %v289
        %v320 = vpack.c.bf16 %v292, %v291
        %v321 = vpack.c.bf16 %v294, %v293
        %v322 = vpack.c.bf16 %v296, %v295
        %v323 = vpack.c.bf16 %v298, %v297
        %v324 = vpack.c.bf16 %v300, %v299
        %v325 = vpack.c.bf16 %v302, %v301
        %v326 = vpack.c.bf16 %v304, %v303
        %v327 = vpack.c.bf16 %v306, %v305
        %v328 = vpack.c.bf16 %v308, %v307
        %v329 = vpack.c.bf16 %v310, %v309
        %v330 = vpack.c.bf16 %v312, %v311
        %v332 = vperm.slane %v314, 0
        %vm334 = vcmask 31744
        %v336 = vsel %vm334, %v315, 0
        %v339 = vsel %vm334, %v316, 0
        %v342 = vsel %vm334, %v317, 0
        %v345 = vsel %vm334, %v318, 0
        %v348 = vsel %vm334, %v319, 0
        %v351 = vsel %vm334, %v320, 0
        %v354 = vsel %vm334, %v321, 0
        %v357 = vsel %vm334, %v322, 0
        %v360 = vsel %vm334, %v323, 0
        %v363 = vsel %vm334, %v324, 0
        %v366 = vsel %vm334, %v325, 0
        %v369 = vsel %vm334, %v326, 0
        %v372 = vsel %vm334, %v327, 0
        %v375 = vsel %vm334, %v328, 0
        %v378 = vsel %vm334, %v329, 0
        %v381 = vsel %vm334, %v330, 0
        %vm383 = vcmask 1041408
        %v385 = vsel %vm383, %v313, 0
        %387 = vmatpush.bf16.msra.mxu0 0
        %388 = vmatpush.bf16.msra.mxu0 0
        %389 = vmatpush.bf16.msra.mxu0 0
        %390 = vmatpush.bf16.msra.mxu0 0
        %391 = vmatpush.bf16.msra.mxu0 0
        %392 = vmatpush.bf16.msra.mxu0 0
        %393 = vmatpush.bf16.msra.mxu0 0
        %394 = vmatpush.bf16.msra.mxu0 %v385
        %395 = vmatmul.bf16.gmra.mxu0 %v336
        %v396 = vpop.f32.mrf.mxu0
        %v397 = vadd.f32 %v332, %v396
        %v398 = vpop.f32.mrf.mxu0
        %v399 = vadd.f32 %v332, %v398
        %400 = vmatmul.bf16.gmra.mxu0 %v339
        %v401 = vpop.f32.mrf.mxu0
        %v402 = vadd.f32 %v332, %v401
        %v403 = vpop.f32.mrf.mxu0
        %v404 = vadd.f32 %v332, %v403
        %405 = vmatmul.bf16.gmra.mxu0 %v342
        %v406 = vpop.f32.mrf.mxu0
        %v407 = vadd.f32 %v332, %v406
        %v408 = vpop.f32.mrf.mxu0
        %v409 = vadd.f32 %v332, %v408
        %410 = vmatmul.bf16.gmra.mxu0 %v345
        %v411 = vpop.f32.mrf.mxu0
        %v412 = vadd.f32 %v332, %v411
        %v413 = vpop.f32.mrf.mxu0
        %v414 = vadd.f32 %v332, %v413
        %415 = vmatmul.bf16.gmra.mxu0 %v348
        %v416 = vpop.f32.mrf.mxu0
        %v417 = vadd.f32 %v332, %v416
        %v418 = vpop.f32.mrf.mxu0
        %v419 = vadd.f32 %v332, %v418
        %420 = vmatmul.bf16.gmra.mxu0 %v351
        %v421 = vpop.f32.mrf.mxu0
        %v422 = vadd.f32 %v332, %v421
        %v423 = vpop.f32.mrf.mxu0
        %v424 = vadd.f32 %v332, %v423
        %425 = vmatmul.bf16.gmra.mxu0 %v354
        %v426 = vpop.f32.mrf.mxu0
        %v427 = vadd.f32 %v332, %v426
        %v428 = vpop.f32.mrf.mxu0
        %v429 = vadd.f32 %v332, %v428
        %430 = vmatmul.bf16.gmra.mxu0 %v357
        %v431 = vpop.f32.mrf.mxu0
        %v432 = vadd.f32 %v332, %v431
        %v433 = vpop.f32.mrf.mxu0
        %v434 = vadd.f32 %v332, %v433
        %435 = vmatmul.bf16.gmra.mxu0 %v360
        %v436 = vpop.f32.mrf.mxu0
        %v437 = vadd.f32 %v332, %v436
        %v438 = vpop.f32.mrf.mxu0
        %v439 = vadd.f32 %v332, %v438
        %440 = vmatmul.bf16.gmra.mxu0 %v363
        %v441 = vpop.f32.mrf.mxu0
        %v442 = vadd.f32 %v332, %v441
        %v443 = vpop.f32.mrf.mxu0
        %v444 = vadd.f32 %v332, %v443
        %445 = vmatmul.bf16.gmra.mxu0 %v366
        %v446 = vpop.f32.mrf.mxu0
        %v447 = vadd.f32 %v332, %v446
        %v448 = vpop.f32.mrf.mxu0
        %v449 = vadd.f32 %v332, %v448
        %450 = vmatmul.bf16.gmra.mxu0 %v369
        %v451 = vpop.f32.mrf.mxu0
        %v452 = vadd.f32 %v332, %v451
        %v453 = vpop.f32.mrf.mxu0
        %v454 = vadd.f32 %v332, %v453
        %455 = vmatmul.bf16.gmra.mxu0 %v372
        %v456 = vpop.f32.mrf.mxu0
        %v457 = vadd.f32 %v332, %v456
        %v458 = vpop.f32.mrf.mxu0
        %v459 = vadd.f32 %v332, %v458
        %460 = vmatmul.bf16.gmra.mxu0 %v375
        %v461 = vpop.f32.mrf.mxu0
        %v462 = vadd.f32 %v332, %v461
        %v463 = vpop.f32.mrf.mxu0
        %v464 = vadd.f32 %v332, %v463
        %465 = vmatmul.bf16.gmra.mxu0 %v378
        %v466 = vpop.f32.mrf.mxu0
        %v467 = vadd.f32 %v332, %v466
        %v468 = vpop.f32.mrf.mxu0
        %v469 = vadd.f32 %v332, %v468
        %470 = vmatmul.bf16.gmra.mxu0 %v381
        %v471 = vpop.f32.mrf.mxu0
        %v472 = vadd.f32 %v332, %v471
        %v473 = vpop.f32.mrf.mxu0
        %v474 = vadd.f32 %v332, %v473
        %475 = vdwg.mxu0
        %v476 = vmax.f32 %v397, 0.0
        %v477 = vmax.f32 %v399, 0.0
        %v478 = vmax.f32 %v402, 0.0
        %v479 = vmax.f32 %v404, 0.0
        %v480 = vmax.f32 %v407, 0.0
        %v481 = vmax.f32 %v409, 0.0
        %v482 = vmax.f32 %v412, 0.0
        %v483 = vmax.f32 %v414, 0.0
        %v484 = vmax.f32 %v417, 0.0
        %v485 = vmax.f32 %v419, 0.0
        %v486 = vmax.f32 %v422, 0.0
        %v487 = vmax.f32 %v424, 0.0
        %v488 = vmax.f32 %v427, 0.0
        %v489 = vmax.f32 %v429, 0.0
        %v490 = vmax.f32 %v432, 0.0
        %v491 = vmax.f32 %v434, 0.0
        %v492 = vmax.f32 %v437, 0.0
        %v493 = vmax.f32 %v439, 0.0
        %v494 = vmax.f32 %v442, 0.0
        %v495 = vmax.f32 %v444, 0.0
        %v496 = vmax.f32 %v447, 0.0
        %v497 = vmax.f32 %v449, 0.0
        %v498 = vmax.f32 %v452, 0.0
        %v499 = vmax.f32 %v454, 0.0
        %v500 = vmax.f32 %v457, 0.0
        %v501 = vmax.f32 %v459, 0.0
        %v502 = vmax.f32 %v462, 0.0
        %v503 = vmax.f32 %v464, 0.0
        %v504 = vmax.f32 %v467, 0.0
        %v505 = vmax.f32 %v469, 0.0
        %v506 = vmax.f32 %v472, 0.0
        %v507 = vmax.f32 %v474, 0.0
        %v508 = vld [vmem:[%s3] sm:$0xf]
        %v509 = vld [vmem:[%s3 + $0x4] sm:$0xf]
        %v510 = vld [vmem:[%s3 + $0x8] sm:$0xf]
        %v511 = vld [vmem:[%s3 + $0xc] sm:$0xf]
        %v512 = vld [vmem:[%s3 + $0x10] sm:$0xf]
        %v513 = vld [vmem:[%s3 + $0x14] sm:$0xf]
        %v514 = vld [vmem:[%s3 + $0x18] sm:$0xf]
        %v515 = vld [vmem:[%s3 + $0x1c] sm:$0xf]
        %v516 = vld [vmem:[%s3 + $0x20] sm:$0xf]
        %v517 = vld [vmem:[%s3 + $0x24] sm:$0xf]
        %v518 = vld [vmem:[%s3 + $0x28] sm:$0xf]
        %v519 = vld [vmem:[%s3 + $0x2c] sm:$0xf]
        %v520 = vld [vmem:[%s3 + $0x30] sm:$0xf]
        %v521 = vld [vmem:[%s3 + $0x34] sm:$0xf]
        %v522 = vld [vmem:[%s3 + $0x38] sm:$0xf]
        %v523 = vld [vmem:[%s3 + $0x3c] sm:$0xf]
        %v524 = vld [vmem:[%s4] sm:$0x1]
        %v525 = vpack.c.bf16 %v477, %v476
        %v526 = vpack.c.bf16 %v479, %v478
        %v527 = vpack.c.bf16 %v481, %v480
        %v528 = vpack.c.bf16 %v483, %v482
        %v529 = vpack.c.bf16 %v485, %v484
        %v530 = vpack.c.bf16 %v487, %v486
        %v531 = vpack.c.bf16 %v489, %v488
        %v532 = vpack.c.bf16 %v491, %v490
        %v533 = vpack.c.bf16 %v493, %v492
        %v534 = vpack.c.bf16 %v495, %v494
        %v535 = vpack.c.bf16 %v497, %v496
        %v536 = vpack.c.bf16 %v499, %v498
        %v537 = vpack.c.bf16 %v501, %v500
        %v538 = vpack.c.bf16 %v503, %v502
        %v539 = vpack.c.bf16 %v505, %v504
        %v540 = vpack.c.bf16 %v507, %v506
        %v542 = vperm.slane %v524, 0
        %v560 = vunpack.c.l.b16 %v508
        %v561 = vunpack.c.l.b16 %v509
        %v562 = vunpack.c.l.b16 %v510
        %v563 = vunpack.c.l.b16 %v511
        %v564 = vunpack.c.l.b16 %v512
        %v565 = vunpack.c.l.b16 %v513
        %v566 = vunpack.c.l.b16 %v514
        %v567 = vunpack.c.l.b16 %v515
        %v568 = vunpack.c.l.b16 %v516
        %v569 = vunpack.c.l.b16 %v517
        %v570 = vunpack.c.l.b16 %v518
        %v571 = vunpack.c.l.b16 %v519
        %v572 = vunpack.c.l.b16 %v520
        %v573 = vunpack.c.l.b16 %v521
        %v574 = vunpack.c.l.b16 %v522
        %v575 = vunpack.c.l.b16 %v523
        %v576 = vpack.c.b16 %v561, %v560
        %v577 = vpack.c.b16 %v563, %v562
        %v578 = vpack.c.b16 %v565, %v564
        %v579 = vpack.c.b16 %v567, %v566
        %v580 = vpack.c.b16 %v569, %v568
        %v581 = vpack.c.b16 %v571, %v570
        %v582 = vpack.c.b16 %v573, %v572
        %v583 = vpack.c.b16 %v575, %v574
        %592 = vmatpush.bf16.msra.mxu0 %v583
        %593 = vmatpush.bf16.msra.mxu0 %v582
        %594 = vmatpush.bf16.msra.mxu0 %v581
        %595 = vmatpush.bf16.msra.mxu0 %v580
        %596 = vmatpush.bf16.msra.mxu0 %v579
        %597 = vmatpush.bf16.msra.mxu0 %v578
        %598 = vmatpush.bf16.msra.mxu0 %v577
        %599 = vmatpush.bf16.msra.mxu0 %v576
        %600 = vmatmul.bf16.gmra.mxu0 %v525
        %v601 = vpop.f32.mrf.mxu0
        %v602 = vadd.f32 %v542, %v601
        %v603 = vpop.f32.mrf.mxu0
        %v604 = vadd.f32 %v542, %v603
        %605 = vmatmul.bf16.gmra.mxu0 %v526
        %v606 = vpop.f32.mrf.mxu0
        %v607 = vadd.f32 %v542, %v606
        %v608 = vpop.f32.mrf.mxu0
        %v609 = vadd.f32 %v542, %v608
        %610 = vmatmul.bf16.gmra.mxu0 %v527
        %v611 = vpop.f32.mrf.mxu0
        %v612 = vadd.f32 %v542, %v611
        %v613 = vpop.f32.mrf.mxu0
        %v614 = vadd.f32 %v542, %v613
        %615 = vmatmul.bf16.gmra.mxu0 %v528
        %v616 = vpop.f32.mrf.mxu0
        %v617 = vadd.f32 %v542, %v616
        %v618 = vpop.f32.mrf.mxu0
        %v619 = vadd.f32 %v542, %v618
        %620 = vmatmul.bf16.gmra.mxu0 %v529
        %v621 = vpop.f32.mrf.mxu0
        %v622 = vadd.f32 %v542, %v621
        %v623 = vpop.f32.mrf.mxu0
        %v624 = vadd.f32 %v542, %v623
        %625 = vmatmul.bf16.gmra.mxu0 %v530
        %v626 = vpop.f32.mrf.mxu0
        %v627 = vadd.f32 %v542, %v626
        %v628 = vpop.f32.mrf.mxu0
        %v629 = vadd.f32 %v542, %v628
        %630 = vmatmul.bf16.gmra.mxu0 %v531
        %v631 = vpop.f32.mrf.mxu0
        %v632 = vadd.f32 %v542, %v631
        %v633 = vpop.f32.mrf.mxu0
        %v634 = vadd.f32 %v542, %v633
        %635 = vmatmul.bf16.gmra.mxu0 %v532
        %v636 = vpop.f32.mrf.mxu0
        %v637 = vadd.f32 %v542, %v636
        %v638 = vpop.f32.mrf.mxu0
        %v639 = vadd.f32 %v542, %v638
        %640 = vmatmul.bf16.gmra.mxu0 %v533
        %v641 = vpop.f32.mrf.mxu0
        %v642 = vadd.f32 %v542, %v641
        %v643 = vpop.f32.mrf.mxu0
        %v644 = vadd.f32 %v542, %v643
        %645 = vmatmul.bf16.gmra.mxu0 %v534
        %v646 = vpop.f32.mrf.mxu0
        %v647 = vadd.f32 %v542, %v646
        %v648 = vpop.f32.mrf.mxu0
        %v649 = vadd.f32 %v542, %v648
        %650 = vmatmul.bf16.gmra.mxu0 %v535
        %v651 = vpop.f32.mrf.mxu0
        %v652 = vadd.f32 %v542, %v651
        %v653 = vpop.f32.mrf.mxu0
        %v654 = vadd.f32 %v542, %v653
        %655 = vmatmul.bf16.gmra.mxu0 %v536
        %v656 = vpop.f32.mrf.mxu0
        %v657 = vadd.f32 %v542, %v656
        %v658 = vpop.f32.mrf.mxu0
        %v659 = vadd.f32 %v542, %v658
        %660 = vmatmul.bf16.gmra.mxu0 %v537
        %v661 = vpop.f32.mrf.mxu0
        %v662 = vadd.f32 %v542, %v661
        %v663 = vpop.f32.mrf.mxu0
        %v664 = vadd.f32 %v542, %v663
        %665 = vmatmul.bf16.gmra.mxu0 %v538
        %v666 = vpop.f32.mrf.mxu0
        %v667 = vadd.f32 %v542, %v666
        %v668 = vpop.f32.mrf.mxu0
        %v669 = vadd.f32 %v542, %v668
        %670 = vmatmul.bf16.gmra.mxu0 %v539
        %v671 = vpop.f32.mrf.mxu0
        %v672 = vadd.f32 %v542, %v671
        %v673 = vpop.f32.mrf.mxu0
        %v674 = vadd.f32 %v542, %v673
        %675 = vmatmul.bf16.gmra.mxu0 %v540
        %v676 = vpop.f32.mrf.mxu0
        %v677 = vadd.f32 %v542, %v676
        %v678 = vpop.f32.mrf.mxu0
        %v679 = vadd.f32 %v542, %v678
        %680 = vdwg.mxu0
        %v681 = vmax.f32 %v602, 0.0
        %v682 = vmax.f32 %v604, 0.0
        %v683 = vmax.f32 %v607, 0.0
        %v684 = vmax.f32 %v609, 0.0
        %v685 = vmax.f32 %v612, 0.0
        %v686 = vmax.f32 %v614, 0.0
        %v687 = vmax.f32 %v617, 0.0
        %v688 = vmax.f32 %v619, 0.0
        %v689 = vmax.f32 %v622, 0.0
        %v690 = vmax.f32 %v624, 0.0
        %v691 = vmax.f32 %v627, 0.0
        %v692 = vmax.f32 %v629, 0.0
        %v693 = vmax.f32 %v632, 0.0
        %v694 = vmax.f32 %v634, 0.0
        %v695 = vmax.f32 %v637, 0.0
        %v696 = vmax.f32 %v639, 0.0
        %v697 = vmax.f32 %v642, 0.0
        %v698 = vmax.f32 %v644, 0.0
        %v699 = vmax.f32 %v647, 0.0
        %v700 = vmax.f32 %v649, 0.0
        %v701 = vmax.f32 %v652, 0.0
        %v702 = vmax.f32 %v654, 0.0
        %v703 = vmax.f32 %v657, 0.0
        %v704 = vmax.f32 %v659, 0.0
        %v705 = vmax.f32 %v662, 0.0
        %v706 = vmax.f32 %v664, 0.0
        %v707 = vmax.f32 %v667, 0.0
        %v708 = vmax.f32 %v669, 0.0
        %v709 = vmax.f32 %v672, 0.0
        %v710 = vmax.f32 %v674, 0.0
        %v711 = vmax.f32 %v677, 0.0
        %v712 = vmax.f32 %v679, 0.0
        %v713 = vld [vmem:[%s5] sm:$0xf]
        %v714 = vld [vmem:[%s5 + $0x4] sm:$0xf]
        %v715 = vld [vmem:[%s5 + $0x8] sm:$0xf]
        %v716 = vld [vmem:[%s5 + $0xc] sm:$0xf]
        %v717 = vld [vmem:[%s5 + $0x10] sm:$0xf]
        %v718 = vld [vmem:[%s5 + $0x14] sm:$0xf]
        %v719 = vld [vmem:[%s5 + $0x18] sm:$0xf]
        %v720 = vld [vmem:[%s5 + $0x1c] sm:$0xf]
        %v721 = vld [vmem:[%s5 + $0x20] sm:$0xf]
        %v722 = vld [vmem:[%s5 + $0x24] sm:$0xf]
        %v723 = vld [vmem:[%s5 + $0x28] sm:$0xf]
        %v724 = vld [vmem:[%s5 + $0x2c] sm:$0xf]
        %v725 = vld [vmem:[%s5 + $0x30] sm:$0xf]
        %v726 = vld [vmem:[%s5 + $0x34] sm:$0xf]
        %v727 = vld [vmem:[%s5 + $0x38] sm:$0xf]
        %v728 = vld [vmem:[%s5 + $0x3c] sm:$0xf]
        %v729 = vld [vmem:[%s6] sm:$0x1]
        %v730 = vpack.c.bf16 %v682, %v681
        %v731 = vpack.c.bf16 %v684, %v683
        %v732 = vpack.c.bf16 %v686, %v685
        %v733 = vpack.c.bf16 %v688, %v687
        %v734 = vpack.c.bf16 %v690, %v689
        %v735 = vpack.c.bf16 %v692, %v691
        %v736 = vpack.c.bf16 %v694, %v693
        %v737 = vpack.c.bf16 %v696, %v695
        %v738 = vpack.c.bf16 %v698, %v697
        %v739 = vpack.c.bf16 %v700, %v699
        %v740 = vpack.c.bf16 %v702, %v701
        %v741 = vpack.c.bf16 %v704, %v703
        %v742 = vpack.c.bf16 %v706, %v705
        %v743 = vpack.c.bf16 %v708, %v707
        %v744 = vpack.c.bf16 %v710, %v709
        %v745 = vpack.c.bf16 %v712, %v711
        %v747 = vperm.slane %v729, 0
        %v765 = vunpack.c.l.b16 %v713
        %v766 = vunpack.c.l.b16 %v714
        %v767 = vunpack.c.l.b16 %v715
        %v768 = vunpack.c.l.b16 %v716
        %v769 = vunpack.c.l.b16 %v717
        %v770 = vunpack.c.l.b16 %v718
        %v771 = vunpack.c.l.b16 %v719
        %v772 = vunpack.c.l.b16 %v720
        %v773 = vunpack.c.l.b16 %v721
        %v774 = vunpack.c.l.b16 %v722
        %v775 = vunpack.c.l.b16 %v723
        %v776 = vunpack.c.l.b16 %v724
        %v777 = vunpack.c.l.b16 %v725
        %v778 = vunpack.c.l.b16 %v726
        %v779 = vunpack.c.l.b16 %v727
        %v780 = vunpack.c.l.b16 %v728
        %v781 = vpack.c.b16 %v766, %v765
        %v782 = vpack.c.b16 %v768, %v767
        %v783 = vpack.c.b16 %v770, %v769
        %v784 = vpack.c.b16 %v772, %v771
        %v785 = vpack.c.b16 %v774, %v773
        %v786 = vpack.c.b16 %v776, %v775
        %v787 = vpack.c.b16 %v778, %v777
        %v788 = vpack.c.b16 %v780, %v779
        %797 = vmatpush.bf16.msra.mxu0 %v788
        %798 = vmatpush.bf16.msra.mxu0 %v787
        %799 = vmatpush.bf16.msra.mxu0 %v786
        %800 = vmatpush.bf16.msra.mxu0 %v785
        %801 = vmatpush.bf16.msra.mxu0 %v784
        %802 = vmatpush.bf16.msra.mxu0 %v783
        %803 = vmatpush.bf16.msra.mxu0 %v782
        %804 = vmatpush.bf16.msra.mxu0 %v781
        %805 = vmatmul.bf16.gmra.mxu0 %v730
        %v806 = vpop.f32.mrf.mxu0
        %v807 = vadd.f32 %v747, %v806
        %v808 = vpop.f32.mrf.mxu0
        %v809 = vadd.f32 %v747, %v808
        %810 = vmatmul.bf16.gmra.mxu0 %v731
        %v811 = vpop.f32.mrf.mxu0
        %v812 = vadd.f32 %v747, %v811
        %v813 = vpop.f32.mrf.mxu0
        %v814 = vadd.f32 %v747, %v813
        %815 = vmatmul.bf16.gmra.mxu0 %v732
        %v816 = vpop.f32.mrf.mxu0
        %v817 = vadd.f32 %v747, %v816
        %v818 = vpop.f32.mrf.mxu0
        %v819 = vadd.f32 %v747, %v818
        %820 = vmatmul.bf16.gmra.mxu0 %v733
        %v821 = vpop.f32.mrf.mxu0
        %v822 = vadd.f32 %v747, %v821
        %v823 = vpop.f32.mrf.mxu0
        %v824 = vadd.f32 %v747, %v823
        %825 = vmatmul.bf16.gmra.mxu0 %v734
        %v826 = vpop.f32.mrf.mxu0
        %v827 = vadd.f32 %v747, %v826
        %v828 = vpop.f32.mrf.mxu0
        %v829 = vadd.f32 %v747, %v828
        %830 = vmatmul.bf16.gmra.mxu0 %v735
        %v831 = vpop.f32.mrf.mxu0
        %v832 = vadd.f32 %v747, %v831
        %v833 = vpop.f32.mrf.mxu0
        %v834 = vadd.f32 %v747, %v833
        %835 = vmatmul.bf16.gmra.mxu0 %v736
        %v836 = vpop.f32.mrf.mxu0
        %v837 = vadd.f32 %v747, %v836
        %v838 = vpop.f32.mrf.mxu0
        %v839 = vadd.f32 %v747, %v838
        %840 = vmatmul.bf16.gmra.mxu0 %v737
        %v841 = vpop.f32.mrf.mxu0
        %v842 = vadd.f32 %v747, %v841
        %v843 = vpop.f32.mrf.mxu0
        %v844 = vadd.f32 %v747, %v843
        %845 = vmatmul.bf16.gmra.mxu0 %v738
        %v846 = vpop.f32.mrf.mxu0
        %v847 = vadd.f32 %v747, %v846
        %v848 = vpop.f32.mrf.mxu0
        %v849 = vadd.f32 %v747, %v848
        %850 = vmatmul.bf16.gmra.mxu0 %v739
        %v851 = vpop.f32.mrf.mxu0
        %v852 = vadd.f32 %v747, %v851
        %v853 = vpop.f32.mrf.mxu0
        %v854 = vadd.f32 %v747, %v853
        %855 = vmatmul.bf16.gmra.mxu0 %v740
        %v856 = vpop.f32.mrf.mxu0
        %v857 = vadd.f32 %v747, %v856
        %v858 = vpop.f32.mrf.mxu0
        %v859 = vadd.f32 %v747, %v858
        %860 = vmatmul.bf16.gmra.mxu0 %v741
        %v861 = vpop.f32.mrf.mxu0
        %v862 = vadd.f32 %v747, %v861
        %v863 = vpop.f32.mrf.mxu0
        %v864 = vadd.f32 %v747, %v863
        %865 = vmatmul.bf16.gmra.mxu0 %v742
        %v866 = vpop.f32.mrf.mxu0
        %v867 = vadd.f32 %v747, %v866
        %v868 = vpop.f32.mrf.mxu0
        %v869 = vadd.f32 %v747, %v868
        %870 = vmatmul.bf16.gmra.mxu0 %v743
        %v871 = vpop.f32.mrf.mxu0
        %v872 = vadd.f32 %v747, %v871
        %v873 = vpop.f32.mrf.mxu0
        %v874 = vadd.f32 %v747, %v873
        %875 = vmatmul.bf16.gmra.mxu0 %v744
        %v876 = vpop.f32.mrf.mxu0
        %v877 = vadd.f32 %v747, %v876
        %v878 = vpop.f32.mrf.mxu0
        %v879 = vadd.f32 %v747, %v878
        %880 = vmatmul.bf16.gmra.mxu0 %v745
        %v881 = vpop.f32.mrf.mxu0
        %v882 = vadd.f32 %v747, %v881
        %v883 = vpop.f32.mrf.mxu0
        %v884 = vadd.f32 %v747, %v883
        %885 = vdwg.mxu0
        %886 = vst [vmem:[%s272] sm:$0xff] %v807
        %887 = vst [vmem:[%s272 + $0x8] sm:$0xff] %v809
        %888 = vst [vmem:[%s272 + $0x10] sm:$0xff] %v812
        %889 = vst [vmem:[%s272 + $0x18] sm:$0xff] %v814
        %890 = vst [vmem:[%s272 + $0x20] sm:$0xff] %v817
        %891 = vst [vmem:[%s272 + $0x28] sm:$0xff] %v819
        %892 = vst [vmem:[%s272 + $0x30] sm:$0xff] %v822
        %893 = vst [vmem:[%s272 + $0x38] sm:$0xff] %v824
        %894 = vst [vmem:[%s272 + $0x40] sm:$0xff] %v827
        %895 = vst [vmem:[%s272 + $0x48] sm:$0xff] %v829
        %896 = vst [vmem:[%s272 + $0x50] sm:$0xff] %v832
        %897 = vst [vmem:[%s272 + $0x58] sm:$0xff] %v834
        %898 = vst [vmem:[%s272 + $0x60] sm:$0xff] %v837
        %899 = vst [vmem:[%s272 + $0x68] sm:$0xff] %v839
        %900 = vst [vmem:[%s272 + $0x70] sm:$0xff] %v842
        %901 = vst [vmem:[%s272 + $0x78] sm:$0xff] %v844
        %902 = vst [vmem:[%s272 + $0x80] sm:$0xff] %v847
        %903 = vst [vmem:[%s272 + $0x88] sm:$0xff] %v849
        %904 = vst [vmem:[%s272 + $0x90] sm:$0xff] %v852
        %905 = vst [vmem:[%s272 + $0x98] sm:$0xff] %v854
        %906 = vst [vmem:[%s272 + $0xa0] sm:$0xff] %v857
        %907 = vst [vmem:[%s272 + $0xa8] sm:$0xff] %v859
        %908 = vst [vmem:[%s272 + $0xb0] sm:$0xff] %v862
        %909 = vst [vmem:[%s272 + $0xb8] sm:$0xff] %v864
        %910 = vst [vmem:[%s272 + $0xc0] sm:$0xff] %v867
        %911 = vst [vmem:[%s272 + $0xc8] sm:$0xff] %v869
        %912 = vst [vmem:[%s272 + $0xd0] sm:$0xff] %v872
        %913 = vst [vmem:[%s272 + $0xd8] sm:$0xff] %v874
        %914 = vst [vmem:[%s272 + $0xe0] sm:$0xff] %v877
        %915 = vst [vmem:[%s272 + $0xe8] sm:$0xff] %v879
        %916 = vst [vmem:[%s272 + $0xf0] sm:$0xff] %v882
        %917 = vst [vmem:[%s272 + $0xf8] sm:$0xff] %v884
        %s918 = sand.u32 %s181, 1
        %s919 = scalar_lea.sflag [#allocation3], %s918
        %s920 = sand.u32 %s181, 1
        %s921 = smul.addr %s920, 256
        %s922 = scalar_lea.vmem [#allocation2], %s921
        // Predicated region
        $region49: #{conv2d_block_forward.1} parent=47 // pred_check
          %p923 = pneg %p191
        $region50: #{conv2d_block_forward.1} parent=47 // pred_check_branch
          %925 = sbr.rel (%p923) target = $region52
        $region51: #{conv2d_block_forward.1} parent=47 // pred_region
          %s926 = smul.u32 32, %s21
          %928 = vsyncadd %s919, 0
          %s929 = smul.addr %s926, 8
          %s930 = scalar_lea.hbm %s7, %s929
          %s931 = sshll.u32 %s922, 4
          %s932 = int_to_ptr.vmem [resolvable:$true] %s931
          %s933 = sshll.u32 %s930, 4
          %s934 = int_to_ptr.hbm [resolvable:$true] %s933
          %939 = dma.vmem_to_hbm [thread:$0]  %s932, 4096, %s934, %s919, 128, 128, 8
        $region52: #{conv2d_block_forward.1} parent=47 // pred_fallthru
          _
      $region48: #{conv2d_block_forward.1} parent=5 // pred_fallthru
        _
      %p940 = scmp.le.s32.totalorder 2, %s16
      // Predicated region
      $region53: #{conv2d_block_forward.1} parent=5 // pred_check
        %p941 = pneg %p940
      $region54: #{conv2d_block_forward.1} parent=5 // pred_check_branch
        %943 = sbr.rel (%p941) target = $region56
      $region55: #{conv2d_block_forward.1} parent=5 // pred_region
        %s944 = ssub.s32 %s16, 2
        // Predicated region
        $region57: #{conv2d_block_forward.1} parent=55 // pred_check
          %p945 = pneg %p197
        $region58: #{conv2d_block_forward.1} parent=55 // pred_check_branch
          %947 = sbr.rel (%p945) target = $region60
        $region59: #{conv2d_block_forward.1} parent=55 // pred_region
          %s948 = sand.u32 %s182, 1
          %s949 = scalar_lea.sflag [#allocation3], %s948
          %s950 = sand.u32 %s182, 1
          %s951 = smul.addr %s950, 256
          %s952 = scalar_lea.vmem [#allocation2], %s951
          %954 = dma.done %s949, 4096
        $region60: #{conv2d_block_forward.1} parent=55 // pred_fallthru
          _
      $region56: #{conv2d_block_forward.1} parent=5 // pred_fallthru
        _
    $region6: #{conv2d_block_forward.1} parent=1 // loop_footer
      %s20 = sadd.s32 1, %s16
    $region7: #{conv2d_block_forward.1} parent=1 // loop_footer_branch
      %15 = sbr.rel target = $region3
    $region8: #{conv2d_block_forward.1} parent=1 // loop_exit
      _
    %955 = vsyncpa [#allocation3], 1
    %s956 = scalar_lea.sflag [#allocation3], 1
    %957 = vsyncpa %s956, 1

</llo_original>
